<compile_context>
chip_gen: v6e
topology: v6e:2x2x1
jax: 0.10.0
libtpu: 0.0.40
codegen_flags: <defaults>
</compile_context>

<pallas_src>
import jax
import jax.numpy as jnp
from jax.experimental import pallas as pl
from jax.experimental.pallas import tpu as pltpu

EPS = 1e-5


def _make_kernel(N, H_out, W_out, WP, Cin, Cout, KH, KW):
    """Fused conv + BN(train) + ReLU kernel, one resident block (grid=(1,))."""
    HW = H_out * W_out          # valid spatial positions per image
    HWp = H_out * WP            # padded-row spatial extent per image (lanes)
    K = KH * KW * Cin           # contraction depth of the fused matmul

    def kernel(x_ref, w_ref, g_ref, b_ref, m_ref, o_ref, col_ref, conv_ref):
        # x_ref   : (N, Cin, LP)      bf16  zero-padded NCHW, spatial flattened
        # w_ref   : (Cout, K)         bf16  taps folded into one K axis
        # g_ref   : (Cout, 1) f32 ; b_ref : (Cout, 1) f32   BN gamma / beta
        # m_ref   : (1, N*HWp)        f32   1.0 on valid cols (w < W_out)
        # o_ref   : (N, Cout, HWp)    f32   padded-width, lane-dense output
        # col_ref : (K, N*HWp)        bf16  batched im2col slab (scratch)
        # conv_ref: (Cout, N*HWp)     f32   parked conv result (scratch)

        # --- build the batched im2col slab.  For tap (kh, kw) the shift in
        #     padded-flat space is kh*WP + kw; row-wrap values land only in
        #     the pad columns w >= W_out, which are masked / dropped. ---
        for n in range(N):                       # N, KH, KW tiny & static
            base = n * HWp
            for kh in range(KH):
                for kw in range(KW):
                    t = kh * KW + kw
                    s = kh * WP + kw
                    col_ref[t * Cin:(t + 1) * Cin, base:base + HWp] = \
                        x_ref[n, :, s:s + HWp]

        # --- one MXU push for the whole batch, f32 accumulation ---
        y = jnp.dot(w_ref[...], col_ref[...],
                    preferred_element_type=jnp.float32)     # (Cout, N*HWp)
        conv_ref[...] = y                                    # park once (f32)

        # --- BatchNorm2d training-mode statistics (masked, one pass) ---
        ym = y * m_ref[...]                                  # pad cols -> 0
        inv_cnt = jnp.float32(1.0 / (N * HW))
        mean = jnp.sum(ym, axis=1, keepdims=True) * inv_cnt          # (Cout,1)
        var = jnp.sum(ym * ym, axis=1, keepdims=True) * inv_cnt - mean * mean
        scale = g_ref[...] * jax.lax.rsqrt(var + EPS)                # (Cout,1)
        shift = b_ref[...] - mean * scale                            # (Cout,1)

        # --- fused normalize + ReLU; o_ref written exactly once, full-width ---
        for n in range(N):
            base = n * HWp
            o_ref[n, :, :] = jnp.maximum(
                conv_ref[:, base:base + HWp] * scale + shift, 0.0)

    return kernel


def basic_conv_forward(x_nchw, w_oihw, gamma, beta, *, stride=1, padding=1,
                       dilation=1, groups=1, relu=True, bn=True):
    """Pallas implementation of BasicConv.forward.  x_nchw: (N, Cin, H, W)."""
    assert stride == 1 and dilation == 1 and groups == 1 and bn and relu

    N, Cin, H, W = x_nchw.shape
    Cout, _, KH, KW = w_oihw.shape
    HP, WP = H + 2 * padding, W + 2 * padding
    H_out = HP - KH + 1
    W_out = WP - KW + 1
    HWp = H_out * WP
    K = KH * KW * Cin

    # Single pad (bf16 cast fused): spatial border plus one extra zero bottom
    # row so the (kh = KH-1, kw > 0) flat-shifted windows stay in bounds.
    x = jnp.pad(x_nchw.astype(jnp.bfloat16),
                ((0, 0), (0, 0), (padding, padding + 1), (padding, padding)))
    LP = (HP + 1) * WP
    x = x.reshape(N, Cin, LP)

    # Fold the taps into the contraction axis: w2[o, (kh*KW + kw)*Cin + ci].
    w2 = jnp.transpose(w_oihw, (0, 2, 3, 1)).reshape(Cout, K)
    w2 = w2.astype(jnp.bfloat16)
    g = gamma.reshape(Cout, 1).astype(jnp.float32)
    b = beta.reshape(Cout, 1).astype(jnp.float32)

    # 1.0 on valid output columns (w < W_out), 0.0 on the pad/wrap columns.
    wpos = jnp.arange(N * HWp, dtype=jnp.int32) % WP
    mask = (wpos < W_out).astype(jnp.float32).reshape(1, N * HWp)

    # Size the VMEM limit from the actual block footprint (double-buffered
    # inputs/outputs + scratch), with generous headroom.
    io_bytes = 2 * (x.size * 2 + w2.size * 2 + g.size * 4 + b.size * 4
                    + mask.size * 4 + N * Cout * HWp * 4)
    scratch_bytes = K * N * HWp * 2 + Cout * N * HWp * 4
    vmem_limit = int(max(8 * 1024 * 1024, 4 * (io_bytes + scratch_bytes)))

    kernel = _make_kernel(N, H_out, W_out, WP, Cin, Cout, KH, KW)
    out = pl.pallas_call(
        kernel,
        out_shape=jax.ShapeDtypeStruct((N, Cout, HWp), jnp.float32),
        grid=(1,),
        in_specs=[
            pl.BlockSpec((N, Cin, LP), lambda i: (0, 0, 0)),
            pl.BlockSpec((Cout, K), lambda i: (0, 0)),
            pl.BlockSpec((Cout, 1), lambda i: (0, 0)),
            pl.BlockSpec((Cout, 1), lambda i: (0, 0)),
            pl.BlockSpec((1, N * HWp), lambda i: (0, 0)),
        ],
        out_specs=pl.BlockSpec((N, Cout, HWp), lambda i: (0, 0, 0)),
        scratch_shapes=[
            pltpu.VMEM((K, N * HWp), jnp.bfloat16),     # im2col slab
            pltpu.VMEM((Cout, N * HWp), jnp.float32),   # parked conv result
        ],
        compiler_params=pltpu.CompilerParams(
            dimension_semantics=("arbitrary",),
            vmem_limit_bytes=vmem_limit),
    )(x, w2, g, b, mask)

    # Pure reshape + slice (no transpose): drop the WP - W_out pad columns.
    return out.reshape(N, Cout, H_out, WP)[:, :, :, :W_out]


def _reference(x_nchw, w_oihw, gamma, beta, padding=1):
    out = jax.lax.conv_general_dilated(
        x_nchw, w_oihw, window_strides=(1, 1),
        padding=[(padding, padding), (padding, padding)],
        dimension_numbers=("NCHW", "OIHW", "NCHW"))
    mean = out.mean(axis=(0, 2, 3), keepdims=True)
    var = out.var(axis=(0, 2, 3), keepdims=True)   # biased, like BN training
    y = gamma.reshape(1, -1, 1, 1) * (out - mean) / jnp.sqrt(var + EPS)
    y = y + beta.reshape(1, -1, 1, 1)
    return jnp.maximum(y, 0.0)


if __name__ == "__main__":
    # Small shapes consistent with BasicConv(in_planes=4, out_planes=8,
    # kernel_size=3, padding=1).
    N, Cin, H, W = 2, 4, 16, 16
    Cout, KH, KW = 8, 3, 3

    key = jax.random.PRNGKey(0)
    kx, kw_, kg, kb = jax.random.split(key, 4)
    x = jax.random.normal(kx, (N, Cin, H, W), jnp.float32)
    w = jax.random.normal(kw_, (Cout, Cin, KH, KW), jnp.float32) * 0.1
    gamma = 1.0 + 0.1 * jax.random.normal(kg, (Cout,), jnp.float32)
    beta = 0.1 * jax.random.normal(kb, (Cout,), jnp.float32)

    out = basic_conv_forward(x, w, gamma, beta, stride=1, padding=1)
    out = jax.block_until_ready(out)

    ref = _reference(x, w, gamma, beta, padding=1)
    assert out.shape == (N, Cout, H, W), out.shape
    # Tolerance accounts for bf16 MXU inputs (f32 accumulation) vs f32 ref.
    assert jnp.allclose(out, ref, atol=3e-2, rtol=3e-2), (
        float(jnp.max(jnp.abs(out - ref))))

    print("KERNEL_OK")
</pallas_src>

<mosaic_0001>
module attributes {stable_mosaic.version = 11 : i64} {
  func.func @kernel(%arg0: i32, %arg1: memref<2x4x342xbf16, #tpu.memory_space<vmem>>, %arg2: memref<8x36xbf16, #tpu.memory_space<vmem>>, %arg3: memref<8x1xf32, #tpu.memory_space<vmem>>, %arg4: memref<8x1xf32, #tpu.memory_space<vmem>>, %arg5: memref<1x576xf32, #tpu.memory_space<vmem>>, %arg6: memref<2x8x288xf32, #tpu.memory_space<vmem>>, %arg7: memref<36x576xbf16, #tpu.memory_space<vmem>>, %arg8: memref<8x576xf32, #tpu.memory_space<vmem>>) attributes {dimension_semantics = [#tpu.dimension_semantics<arbitrary>], iteration_bounds = array<i64: 1>, scalar_prefetch = 0 : i64, scratch_operands = 2 : i64, tpu.core_type = #tpu.core_type<tc>, window_params = [{pipeline_mode = #tpu.pipeline_mode<synchronous>, transform_indices = @transform_0, window_bounds = array<i64: 2, 4, 342>}, {pipeline_mode = #tpu.pipeline_mode<synchronous>, transform_indices = @transform_1, window_bounds = array<i64: 8, 36>}, {pipeline_mode = #tpu.pipeline_mode<synchronous>, transform_indices = @transform_2, window_bounds = array<i64: 8, 1>}, {pipeline_mode = #tpu.pipeline_mode<synchronous>, transform_indices = @transform_3, window_bounds = array<i64: 8, 1>}, {pipeline_mode = #tpu.pipeline_mode<synchronous>, transform_indices = @transform_4, window_bounds = array<i64: 1, 576>}, {pipeline_mode = #tpu.pipeline_mode<synchronous>, transform_indices = @transform_5, window_bounds = array<i64: 2, 8, 288>}]} {
    %c0 = arith.constant 0 : index
    %c0_0 = arith.constant 0 : index
    %c0_1 = arith.constant 0 : index
    %0 = vector.load %arg1[%c0, %c0_0, %c0_1] : memref<2x4x342xbf16, #tpu.memory_space<vmem>>, vector<1x4x288xbf16>
    %1 = vector.shape_cast %0 : vector<1x4x288xbf16> to vector<4x288xbf16>
    %c0_2 = arith.constant 0 : index
    %c0_3 = arith.constant 0 : index
    %2 = vector.load %arg7[%c0_2, %c0_3] : memref<36x576xbf16, #tpu.memory_space<vmem>>, vector<4x288xbf16>
    tpu.vector_store %arg7[%c0_2, %c0_3], %1 {strides = array<i32>} : memref<36x576xbf16, #tpu.memory_space<vmem>>, vector<4x288xbf16>,
    %c0_4 = arith.constant 0 : index
    %c0_5 = arith.constant 0 : index
    %c1 = arith.constant 1 : index
    %3 = vector.load %arg1[%c0_4, %c0_5, %c1] : memref<2x4x342xbf16, #tpu.memory_space<vmem>>, vector<1x4x288xbf16>
    %4 = vector.shape_cast %3 : vector<1x4x288xbf16> to vector<4x288xbf16>
    %c4 = arith.constant 4 : index
    %c0_6 = arith.constant 0 : index
    %5 = vector.load %arg7[%c4, %c0_6] : memref<36x576xbf16, #tpu.memory_space<vmem>>, vector<4x288xbf16>
    tpu.vector_store %arg7[%c4, %c0_6], %4 {strides = array<i32>} : memref<36x576xbf16, #tpu.memory_space<vmem>>, vector<4x288xbf16>,
    %c0_7 = arith.constant 0 : index
    %c0_8 = arith.constant 0 : index
    %c2 = arith.constant 2 : index
    %6 = vector.load %arg1[%c0_7, %c0_8, %c2] : memref<2x4x342xbf16, #tpu.memory_space<vmem>>, vector<1x4x288xbf16>
    %7 = vector.shape_cast %6 : vector<1x4x288xbf16> to vector<4x288xbf16>
    %c8 = arith.constant 8 : index
    %c0_9 = arith.constant 0 : index
    %8 = vector.load %arg7[%c8, %c0_9] : memref<36x576xbf16, #tpu.memory_space<vmem>>, vector<4x288xbf16>
    tpu.vector_store %arg7[%c8, %c0_9], %7 {strides = array<i32>} : memref<36x576xbf16, #tpu.memory_space<vmem>>, vector<4x288xbf16>,
    %c0_10 = arith.constant 0 : index
    %c0_11 = arith.constant 0 : index
    %c18 = arith.constant 18 : index
    %9 = vector.load %arg1[%c0_10, %c0_11, %c18] : memref<2x4x342xbf16, #tpu.memory_space<vmem>>, vector<1x4x288xbf16>
    %10 = vector.shape_cast %9 : vector<1x4x288xbf16> to vector<4x288xbf16>
    %c12 = arith.constant 12 : index
    %c0_12 = arith.constant 0 : index
    %11 = vector.load %arg7[%c12, %c0_12] : memref<36x576xbf16, #tpu.memory_space<vmem>>, vector<4x288xbf16>
    tpu.vector_store %arg7[%c12, %c0_12], %10 {strides = array<i32>} : memref<36x576xbf16, #tpu.memory_space<vmem>>, vector<4x288xbf16>,
    %c0_13 = arith.constant 0 : index
    %c0_14 = arith.constant 0 : index
    %c19 = arith.constant 19 : index
    %12 = vector.load %arg1[%c0_13, %c0_14, %c19] : memref<2x4x342xbf16, #tpu.memory_space<vmem>>, vector<1x4x288xbf16>
    %13 = vector.shape_cast %12 : vector<1x4x288xbf16> to vector<4x288xbf16>
    %c16 = arith.constant 16 : index
    %c0_15 = arith.constant 0 : index
    %14 = vector.load %arg7[%c16, %c0_15] : memref<36x576xbf16, #tpu.memory_space<vmem>>, vector<4x288xbf16>
    tpu.vector_store %arg7[%c16, %c0_15], %13 {strides = array<i32>} : memref<36x576xbf16, #tpu.memory_space<vmem>>, vector<4x288xbf16>,
    %c0_16 = arith.constant 0 : index
    %c0_17 = arith.constant 0 : index
    %c20 = arith.constant 20 : index
    %15 = vector.load %arg1[%c0_16, %c0_17, %c20] : memref<2x4x342xbf16, #tpu.memory_space<vmem>>, vector<1x4x288xbf16>
    %16 = vector.shape_cast %15 : vector<1x4x288xbf16> to vector<4x288xbf16>
    %c20_18 = arith.constant 20 : index
    %c0_19 = arith.constant 0 : index
    %17 = vector.load %arg7[%c20_18, %c0_19] : memref<36x576xbf16, #tpu.memory_space<vmem>>, vector<4x288xbf16>
    tpu.vector_store %arg7[%c20_18, %c0_19], %16 {strides = array<i32>} : memref<36x576xbf16, #tpu.memory_space<vmem>>, vector<4x288xbf16>,
    %c0_20 = arith.constant 0 : index
    %c0_21 = arith.constant 0 : index
    %c36 = arith.constant 36 : index
    %18 = vector.load %arg1[%c0_20, %c0_21, %c36] : memref<2x4x342xbf16, #tpu.memory_space<vmem>>, vector<1x4x288xbf16>
    %19 = vector.shape_cast %18 : vector<1x4x288xbf16> to vector<4x288xbf16>
    %c24 = arith.constant 24 : index
    %c0_22 = arith.constant 0 : index
    %20 = vector.load %arg7[%c24, %c0_22] : memref<36x576xbf16, #tpu.memory_space<vmem>>, vector<4x288xbf16>
    tpu.vector_store %arg7[%c24, %c0_22], %19 {strides = array<i32>} : memref<36x576xbf16, #tpu.memory_space<vmem>>, vector<4x288xbf16>,
    %c0_23 = arith.constant 0 : index
    %c0_24 = arith.constant 0 : index
    %c37 = arith.constant 37 : index
    %21 = vector.load %arg1[%c0_23, %c0_24, %c37] : memref<2x4x342xbf16, #tpu.memory_space<vmem>>, vector<1x4x288xbf16>
    %22 = vector.shape_cast %21 : vector<1x4x288xbf16> to vector<4x288xbf16>
    %c28 = arith.constant 28 : index
    %c0_25 = arith.constant 0 : index
    %23 = vector.load %arg7[%c28, %c0_25] : memref<36x576xbf16, #tpu.memory_space<vmem>>, vector<4x288xbf16>
    tpu.vector_store %arg7[%c28, %c0_25], %22 {strides = array<i32>} : memref<36x576xbf16, #tpu.memory_space<vmem>>, vector<4x288xbf16>,
    %c0_26 = arith.constant 0 : index
    %c0_27 = arith.constant 0 : index
    %c38 = arith.constant 38 : index
    %24 = vector.load %arg1[%c0_26, %c0_27, %c38] : memref<2x4x342xbf16, #tpu.memory_space<vmem>>, vector<1x4x288xbf16>
    %25 = vector.shape_cast %24 : vector<1x4x288xbf16> to vector<4x288xbf16>
    %c32 = arith.constant 32 : index
    %c0_28 = arith.constant 0 : index
    %26 = vector.load %arg7[%c32, %c0_28] : memref<36x576xbf16, #tpu.memory_space<vmem>>, vector<4x288xbf16>
    tpu.vector_store %arg7[%c32, %c0_28], %25 {strides = array<i32>} : memref<36x576xbf16, #tpu.memory_space<vmem>>, vector<4x288xbf16>,
    %c1_29 = arith.constant 1 : index
    %c0_30 = arith.constant 0 : index
    %c0_31 = arith.constant 0 : index
    %27 = vector.load %arg1[%c1_29, %c0_30, %c0_31] : memref<2x4x342xbf16, #tpu.memory_space<vmem>>, vector<1x4x288xbf16>
    %28 = vector.shape_cast %27 : vector<1x4x288xbf16> to vector<4x288xbf16>
    %c0_32 = arith.constant 0 : index
    %c288 = arith.constant 288 : index
    %29 = vector.load %arg7[%c0_32, %c288] : memref<36x576xbf16, #tpu.memory_space<vmem>>, vector<4x288xbf16>
    tpu.vector_store %arg7[%c0_32, %c288], %28 {strides = array<i32>} : memref<36x576xbf16, #tpu.memory_space<vmem>>, vector<4x288xbf16>,
    %c1_33 = arith.constant 1 : index
    %c0_34 = arith.constant 0 : index
    %c1_35 = arith.constant 1 : index
    %30 = vector.load %arg1[%c1_33, %c0_34, %c1_35] : memref<2x4x342xbf16, #tpu.memory_space<vmem>>, vector<1x4x288xbf16>
    %31 = vector.shape_cast %30 : vector<1x4x288xbf16> to vector<4x288xbf16>
    %c4_36 = arith.constant 4 : index
    %c288_37 = arith.constant 288 : index
    %32 = vector.load %arg7[%c4_36, %c288_37] : memref<36x576xbf16, #tpu.memory_space<vmem>>, vector<4x288xbf16>
    tpu.vector_store %arg7[%c4_36, %c288_37], %31 {strides = array<i32>} : memref<36x576xbf16, #tpu.memory_space<vmem>>, vector<4x288xbf16>,
    %c1_38 = arith.constant 1 : index
    %c0_39 = arith.constant 0 : index
    %c2_40 = arith.constant 2 : index
    %33 = vector.load %arg1[%c1_38, %c0_39, %c2_40] : memref<2x4x342xbf16, #tpu.memory_space<vmem>>, vector<1x4x288xbf16>
    %34 = vector.shape_cast %33 : vector<1x4x288xbf16> to vector<4x288xbf16>
    %c8_41 = arith.constant 8 : index
    %c288_42 = arith.constant 288 : index
    %35 = vector.load %arg7[%c8_41, %c288_42] : memref<36x576xbf16, #tpu.memory_space<vmem>>, vector<4x288xbf16>
    tpu.vector_store %arg7[%c8_41, %c288_42], %34 {strides = array<i32>} : memref<36x576xbf16, #tpu.memory_space<vmem>>, vector<4x288xbf16>,
    %c1_43 = arith.constant 1 : index
    %c0_44 = arith.constant 0 : index
    %c18_45 = arith.constant 18 : index
    %36 = vector.load %arg1[%c1_43, %c0_44, %c18_45] : memref<2x4x342xbf16, #tpu.memory_space<vmem>>, vector<1x4x288xbf16>
    %37 = vector.shape_cast %36 : vector<1x4x288xbf16> to vector<4x288xbf16>
    %c12_46 = arith.constant 12 : index
    %c288_47 = arith.constant 288 : index
    %38 = vector.load %arg7[%c12_46, %c288_47] : memref<36x576xbf16, #tpu.memory_space<vmem>>, vector<4x288xbf16>
    tpu.vector_store %arg7[%c12_46, %c288_47], %37 {strides = array<i32>} : memref<36x576xbf16, #tpu.memory_space<vmem>>, vector<4x288xbf16>,
    %c1_48 = arith.constant 1 : index
    %c0_49 = arith.constant 0 : index
    %c19_50 = arith.constant 19 : index
    %39 = vector.load %arg1[%c1_48, %c0_49, %c19_50] : memref<2x4x342xbf16, #tpu.memory_space<vmem>>, vector<1x4x288xbf16>
    %40 = vector.shape_cast %39 : vector<1x4x288xbf16> to vector<4x288xbf16>
    %c16_51 = arith.constant 16 : index
    %c288_52 = arith.constant 288 : index
    %41 = vector.load %arg7[%c16_51, %c288_52] : memref<36x576xbf16, #tpu.memory_space<vmem>>, vector<4x288xbf16>
    tpu.vector_store %arg7[%c16_51, %c288_52], %40 {strides = array<i32>} : memref<36x576xbf16, #tpu.memory_space<vmem>>, vector<4x288xbf16>,
    %c1_53 = arith.constant 1 : index
    %c0_54 = arith.constant 0 : index
    %c20_55 = arith.constant 20 : index
    %42 = vector.load %arg1[%c1_53, %c0_54, %c20_55] : memref<2x4x342xbf16, #tpu.memory_space<vmem>>, vector<1x4x288xbf16>
    %43 = vector.shape_cast %42 : vector<1x4x288xbf16> to vector<4x288xbf16>
    %c20_56 = arith.constant 20 : index
    %c288_57 = arith.constant 288 : index
    %44 = vector.load %arg7[%c20_56, %c288_57] : memref<36x576xbf16, #tpu.memory_space<vmem>>, vector<4x288xbf16>
    tpu.vector_store %arg7[%c20_56, %c288_57], %43 {strides = array<i32>} : memref<36x576xbf16, #tpu.memory_space<vmem>>, vector<4x288xbf16>,
    %c1_58 = arith.constant 1 : index
    %c0_59 = arith.constant 0 : index
    %c36_60 = arith.constant 36 : index
    %45 = vector.load %arg1[%c1_58, %c0_59, %c36_60] : memref<2x4x342xbf16, #tpu.memory_space<vmem>>, vector<1x4x288xbf16>
    %46 = vector.shape_cast %45 : vector<1x4x288xbf16> to vector<4x288xbf16>
    %c24_61 = arith.constant 24 : index
    %c288_62 = arith.constant 288 : index
    %47 = vector.load %arg7[%c24_61, %c288_62] : memref<36x576xbf16, #tpu.memory_space<vmem>>, vector<4x288xbf16>
    tpu.vector_store %arg7[%c24_61, %c288_62], %46 {strides = array<i32>} : memref<36x576xbf16, #tpu.memory_space<vmem>>, vector<4x288xbf16>,
    %c1_63 = arith.constant 1 : index
    %c0_64 = arith.constant 0 : index
    %c37_65 = arith.constant 37 : index
    %48 = vector.load %arg1[%c1_63, %c0_64, %c37_65] : memref<2x4x342xbf16, #tpu.memory_space<vmem>>, vector<1x4x288xbf16>
    %49 = vector.shape_cast %48 : vector<1x4x288xbf16> to vector<4x288xbf16>
    %c28_66 = arith.constant 28 : index
    %c288_67 = arith.constant 288 : index
    %50 = vector.load %arg7[%c28_66, %c288_67] : memref<36x576xbf16, #tpu.memory_space<vmem>>, vector<4x288xbf16>
    tpu.vector_store %arg7[%c28_66, %c288_67], %49 {strides = array<i32>} : memref<36x576xbf16, #tpu.memory_space<vmem>>, vector<4x288xbf16>,
    %c1_68 = arith.constant 1 : index
    %c0_69 = arith.constant 0 : index
    %c38_70 = arith.constant 38 : index
    %51 = vector.load %arg1[%c1_68, %c0_69, %c38_70] : memref<2x4x342xbf16, #tpu.memory_space<vmem>>, vector<1x4x288xbf16>
    %52 = vector.shape_cast %51 : vector<1x4x288xbf16> to vector<4x288xbf16>
    %c32_71 = arith.constant 32 : index
    %c288_72 = arith.constant 288 : index
    %53 = vector.load %arg7[%c32_71, %c288_72] : memref<36x576xbf16, #tpu.memory_space<vmem>>, vector<4x288xbf16>
    tpu.vector_store %arg7[%c32_71, %c288_72], %52 {strides = array<i32>} : memref<36x576xbf16, #tpu.memory_space<vmem>>, vector<4x288xbf16>,
    %c0_73 = arith.constant 0 : index
    %c0_74 = arith.constant 0 : index
    %54 = vector.load %arg2[%c0_73, %c0_74] : memref<8x36xbf16, #tpu.memory_space<vmem>>, vector<8x36xbf16>
    %c0_75 = arith.constant 0 : index
    %c0_76 = arith.constant 0 : index
    %55 = vector.load %arg7[%c0_75, %c0_76] : memref<36x576xbf16, #tpu.memory_space<vmem>>, vector<36x576xbf16>
    %cst = arith.constant dense<0.000000e+00> : vector<8x576xf32>
    %56 = tpu.matmul %54, %55, %cst {dimension_numbers = #tpu.dot_dimension_numbers<[1], [0], [0], [1], [0, 0, 1, 1], [], []>} : vector<8x36xbf16>, vector<36x576xbf16>, vector<8x576xf32> -> vector<8x576xf32>
    %c0_77 = arith.constant 0 : index
    %c0_78 = arith.constant 0 : index
    %57 = vector.load %arg8[%c0_77, %c0_78] : memref<8x576xf32, #tpu.memory_space<vmem>>, vector<8x576xf32>
    tpu.vector_store %arg8[%c0_77, %c0_78], %56 {strides = array<i32>} : memref<8x576xf32, #tpu.memory_space<vmem>>, vector<8x576xf32>,
    %c0_79 = arith.constant 0 : index
    %c0_80 = arith.constant 0 : index
    %58 = vector.load %arg5[%c0_79, %c0_80] : memref<1x576xf32, #tpu.memory_space<vmem>>, vector<1x576xf32>
    %59 = vector.broadcast %58 : vector<1x576xf32> to vector<8x576xf32>
    %60 = arith.mulf %56, %59 : vector<8x576xf32>
    %cst_81 = arith.constant dense<0.000000e+00> : vector<8xf32>
    %61 = vector.multi_reduction <add>, %60, %cst_81 [1] : vector<8x576xf32> to vector<8xf32>
    %62 = vector.shape_cast %61 : vector<8xf32> to vector<8x1xf32>
    %cst_82 = arith.constant 0.001953125 : f32
    %63 = vector.broadcast %cst_82 : f32 to vector<8x1xf32>
    %64 = arith.mulf %62, %63 : vector<8x1xf32>
    %65 = arith.mulf %60, %60 : vector<8x576xf32>
    %cst_83 = arith.constant dense<0.000000e+00> : vector<8xf32>
    %66 = vector.multi_reduction <add>, %65, %cst_83 [1] : vector<8x576xf32> to vector<8xf32>
    %67 = vector.shape_cast %66 : vector<8xf32> to vector<8x1xf32>
    %cst_84 = arith.constant 0.001953125 : f32
    %68 = vector.broadcast %cst_84 : f32 to vector<8x1xf32>
    %69 = arith.mulf %67, %68 : vector<8x1xf32>
    %70 = arith.mulf %64, %64 : vector<8x1xf32>
    %71 = arith.subf %69, %70 : vector<8x1xf32>
    %c0_85 = arith.constant 0 : index
    %c0_86 = arith.constant 0 : index
    %72 = vector.load %arg3[%c0_85, %c0_86] : memref<8x1xf32, #tpu.memory_space<vmem>>, vector<8x1xf32>
    %cst_87 = arith.constant 9.99999974E-6 : f32
    %73 = vector.broadcast %cst_87 : f32 to vector<8x1xf32>
    %74 = arith.addf %71, %73 : vector<8x1xf32>
    %75 = math.rsqrt %74 : vector<8x1xf32>
    %76 = arith.mulf %72, %75 : vector<8x1xf32>
    %c0_88 = arith.constant 0 : index
    %c0_89 = arith.constant 0 : index
    %77 = vector.load %arg4[%c0_88, %c0_89] : memref<8x1xf32, #tpu.memory_space<vmem>>, vector<8x1xf32>
    %78 = arith.mulf %64, %76 : vector<8x1xf32>
    %79 = arith.subf %77, %78 : vector<8x1xf32>
    %c0_90 = arith.constant 0 : index
    %c0_91 = arith.constant 0 : index
    %80 = vector.load %arg8[%c0_90, %c0_91] : memref<8x576xf32, #tpu.memory_space<vmem>>, vector<8x288xf32>
    %81 = vector.broadcast %76 : vector<8x1xf32> to vector<8x288xf32>
    %82 = arith.mulf %80, %81 : vector<8x288xf32>
    %83 = vector.broadcast %79 : vector<8x1xf32> to vector<8x288xf32>
    %84 = arith.addf %82, %83 : vector<8x288xf32>
    %cst_92 = arith.constant 0.000000e+00 : f32
    %85 = vector.broadcast %cst_92 : f32 to vector<8x288xf32>
    %86 = arith.maximumf %84, %85 : vector<8x288xf32>
    %c0_93 = arith.constant 0 : index
    %c0_94 = arith.constant 0 : index
    %c0_95 = arith.constant 0 : index
    %87 = vector.load %arg6[%c0_93, %c0_94, %c0_95] : memref<2x8x288xf32, #tpu.memory_space<vmem>>, vector<1x8x288xf32>
    %88 = vector.shape_cast %87 : vector<1x8x288xf32> to vector<8x288xf32>
    %89 = vector.shape_cast %86 : vector<8x288xf32> to vector<1x8x288xf32>
    tpu.vector_store %arg6[%c0_93, %c0_94, %c0_95], %89 {strides = array<i32>} : memref<2x8x288xf32, #tpu.memory_space<vmem>>, vector<1x8x288xf32>,
    %c0_96 = arith.constant 0 : index
    %c288_97 = arith.constant 288 : index
    %90 = vector.load %arg8[%c0_96, %c288_97] : memref<8x576xf32, #tpu.memory_space<vmem>>, vector<8x288xf32>
    %91 = vector.broadcast %76 : vector<8x1xf32> to vector<8x288xf32>
    %92 = arith.mulf %90, %91 : vector<8x288xf32>
    %93 = vector.broadcast %79 : vector<8x1xf32> to vector<8x288xf32>
    %94 = arith.addf %92, %93 : vector<8x288xf32>
    %cst_98 = arith.constant 0.000000e+00 : f32
    %95 = vector.broadcast %cst_98 : f32 to vector<8x288xf32>
    %96 = arith.maximumf %94, %95 : vector<8x288xf32>
    %c1_99 = arith.constant 1 : index
    %c0_100 = arith.constant 0 : index
    %c0_101 = arith.constant 0 : index
    %97 = vector.load %arg6[%c1_99, %c0_100, %c0_101] : memref<2x8x288xf32, #tpu.memory_space<vmem>>, vector<1x8x288xf32>
    %98 = vector.shape_cast %97 : vector<1x8x288xf32> to vector<8x288xf32>
    %99 = vector.shape_cast %96 : vector<8x288xf32> to vector<1x8x288xf32>
    tpu.vector_store %arg6[%c1_99, %c0_100, %c0_101], %99 {strides = array<i32>} : memref<2x8x288xf32, #tpu.memory_space<vmem>>, vector<1x8x288xf32>,
    return
  }
  func.func @transform_0(%arg0: i32) -> (i32, i32, i32) {
    %c0_i32 = arith.constant 0 : i32
    %c0_i32_0 = arith.constant 0 : i32
    %c0_i32_1 = arith.constant 0 : i32
    %c0_i32_2 = arith.constant 0 : i32
    return %c0_i32, %c0_i32_0, %c0_i32_1 : i32, i32, i32
  }
  func.func @transform_1(%arg0: i32) -> (i32, i32) {
    %c0_i32 = arith.constant 0 : i32
    %c0_i32_0 = arith.constant 0 : i32
    %c0_i32_1 = arith.constant 0 : i32
    return %c0_i32, %c0_i32_0 : i32, i32
  }
  func.func @transform_2(%arg0: i32) -> (i32, i32) {
    %c0_i32 = arith.constant 0 : i32
    %c0_i32_0 = arith.constant 0 : i32
    %c0_i32_1 = arith.constant 0 : i32
    return %c0_i32, %c0_i32_0 : i32, i32
  }
  func.func @transform_3(%arg0: i32) -> (i32, i32) {
    %c0_i32 = arith.constant 0 : i32
    %c0_i32_0 = arith.constant 0 : i32
    %c0_i32_1 = arith.constant 0 : i32
    return %c0_i32, %c0_i32_0 : i32, i32
  }
  func.func @transform_4(%arg0: i32) -> (i32, i32) {
    %c0_i32 = arith.constant 0 : i32
    %c0_i32_0 = arith.constant 0 : i32
    %c0_i32_1 = arith.constant 0 : i32
    return %c0_i32, %c0_i32_0 : i32, i32
  }
  func.func @transform_5(%arg0: i32) -> (i32, i32, i32) {
    %c0_i32 = arith.constant 0 : i32
    %c0_i32_0 = arith.constant 0 : i32
    %c0_i32_1 = arith.constant 0 : i32
    %c0_i32_2 = arith.constant 0 : i32
    return %c0_i32, %c0_i32_0, %c0_i32_1 : i32, i32, i32
  }
}

</mosaic_0001>

<llo_original>
// kernel: tpu_custom_call.1
$region0: #{tpu_custom_call.1}
  #allocation0 [shape = 'u32[]', space=smem, size = 0x4, offset = 0x4, fixed_abs, tag = 'smem constant byte address 0x4 - core index']
  #allocation1 [shape = 'u32[144,128]{1,0:T(1,128)}', space=vmem, size = 0x12000, scoped, tag = 'internal scratch']
  #allocation2 [shape = 'bf16[36,576]{1,0:T(8,128)(2,1)}', space=vmem, size = 0xc800, scoped, tag = 'scratch operand']
  #allocation3 [shape = 'f32[8,576]{1,0:T(8,128)}', space=vmem, size = 0x5000, scoped, tag = 'scratch operand']
  %s0 = inlined_call_operand.vmem [shape: bf16[2,4,342], index: 0, kind: input, shape index: {}]
  %s1 = inlined_call_operand.hbm [shape: bf16[8,36], index: 1, kind: input, shape index: {}]
  %s2 = inlined_call_operand.vmem [shape: f32[8,1], index: 2, kind: input, shape index: {}]
  %s3 = inlined_call_operand.vmem [shape: f32[8,1], index: 3, kind: input, shape index: {}]
  %s4 = inlined_call_operand.vmem [shape: f32[1,576], index: 4, kind: input, shape index: {}]
  %s5 = inlined_call_operand.hbm [shape: f32[2,8,288], index: 5, kind: output, shape index: {}]
  %s6 = sld [smem:[#allocation0]]
  $region34: #{tpu_custom_call.1} parent=0
    _
  %s8 = ssub.s32 1, %s6
  %s9 = scalar_select 0, %s8, %s6
  $region1: #{tpu_custom_call.1} parent=0
    #allocation4 [shape = 'u8[2048]{0}', space=vmem, size = 0x800, scoped, tag = 'input window, operand 1, single buffered']
    #allocation5 [shape = 's32[1]{0}', space=sflag, size = 0x4, scoped, tag = 'scoped memory for tpu_custom_call.1']
    #allocation6 [shape = 's32[1]{0}', space=sflag, size = 0x4, scoped, tag = 'scoped memory for tpu_custom_call.1']
    #allocation7 [shape = 'u8[24576]{0}', space=vmem, size = 0x6000, scoped, tag = 'output window, operand 0, single buffered']
    %10 = vsyncpa [#allocation5], 0
    %11 = vsyncpa [#allocation6], 0
    // Predicated region
    $region2: #{tpu_custom_call.1} parent=1 // pred_check
      _
    $region3: #{tpu_custom_call.1} parent=1 // pred_check_branch
      %13 = sbr.rel (0) target = $region5
    $region4: #{tpu_custom_call.1} parent=1 // pred_region
      _
    $region5: #{tpu_custom_call.1} parent=1 // pred_fallthru
      _
    // Predicated region
    $region6: #{tpu_custom_call.1} parent=1 // pred_check
      _
    $region7: #{tpu_custom_call.1} parent=1 // pred_check_branch
      %15 = sbr.rel (0) target = $region9
    $region8: #{tpu_custom_call.1} parent=1 // pred_region
      %s17 = ssub.s32 64, 64
      %18 = vsyncadd [#allocation5], %s17
      %s20 = sshll.u32 [#allocation4], 4
      %s21 = int_to_ptr.vmem [resolvable:$true] %s20
      %23 = dma.hbm_to_vmem [thread:$0]  %s1, 64, %s21, [#allocation5]
    $region9: #{tpu_custom_call.1} parent=1 // pred_fallthru
      _
    // Predicated region
    $region10: #{tpu_custom_call.1} parent=1 // pred_check
      _
    $region11: #{tpu_custom_call.1} parent=1 // pred_check_branch
      %25 = sbr.rel (0) target = $region13
    $region12: #{tpu_custom_call.1} parent=1 // pred_region
      _
    $region13: #{tpu_custom_call.1} parent=1 // pred_fallthru
      _
    // Predicated region
    $region14: #{tpu_custom_call.1} parent=1 // pred_check
      _
    $region15: #{tpu_custom_call.1} parent=1 // pred_check_branch
      %27 = sbr.rel (0) target = $region17
    $region16: #{tpu_custom_call.1} parent=1 // pred_region
      _
    $region17: #{tpu_custom_call.1} parent=1 // pred_fallthru
      _
    // Predicated region
    $region18: #{tpu_custom_call.1} parent=1 // pred_check
      _
    $region19: #{tpu_custom_call.1} parent=1 // pred_check_branch
      %29 = sbr.rel (0) target = $region21
    $region20: #{tpu_custom_call.1} parent=1 // pred_region
      _
    $region21: #{tpu_custom_call.1} parent=1 // pred_fallthru
      _
    // Predicated region
    $region22: #{tpu_custom_call.1} parent=1 // pred_check
      _
    $region23: #{tpu_custom_call.1} parent=1 // pred_check_branch
      %31 = sbr.rel (0) target = $region25
    $region24: #{tpu_custom_call.1} parent=1 // pred_region
      %32 = dma.done [#allocation5], 64
    $region25: #{tpu_custom_call.1} parent=1 // pred_fallthru
      _
    %v34 = vld [vmem:[%s0] sm:$0x3f]
    %v36 = vcombine.high %v34, %v34
    %v38 = vunpack.c.l.s4 1983009808
    %v39 = vunpack.c.0.s8 %v38
    %v40 = vlaneseq
    %v41 = vshrl.u32 %v40, 7
    %v42 = vsub.s32 %v39, %v41
    %v43 = vrot.slane %v34, %v42
    %v45 = vunpack.c.l.s4 1983009808
    %v46 = vunpack.c.0.s8 %v45
    %v47 = vlaneseq
    %v48 = vshrl.u32 %v47, 7
    %v49 = vsub.s32 %v46, %v48
    %v50 = vrot.slane %v36, %v49
    %53 = vst [vmem:[#allocation2] sm:$0x33] %v43
    %vm54 = vcmask 254976
    %55 = vst.msk [vmem:[#allocation2 + $0x8] sm:$0x3] %vm54, %v50
    %v56 = vld [vmem:[%s0] sm:$0x3f]
    %v58 = vcombine.low %v56, %v56
    %v60 = vunpack.c.l.s4 1983009808
    %v61 = vunpack.c.0.s8 %v60
    %v62 = vlaneseq
    %v63 = vshrl.u32 %v62, 7
    %v64 = vsub.s32 %v61, %v63
    %v65 = vrot.slane %v58, %v64
    %v67 = vunpack.c.l.s4 1983009808
    %v68 = vunpack.c.0.s8 %v67
    %v69 = vlaneseq
    %v70 = vshrl.u32 %v69, 7
    %v71 = vsub.s32 %v68, %v70
    %v72 = vrot.slane %v56, %v71
    %73 = vrot.lane.b32.xlu0 %v65, 127
    %v74 = vpop.permute.xlu0 %73
    %75 = vrot.lane.b32.xlu0 %v72, 127
    %v76 = vpop.permute.xlu0 %75
    %v77 = vrot.slane %v74, 4
    %v78 = vrot.slane %v76, 4
    %vm79 = vcmask 1043456
    %v80 = vsel %vm79, %v77, %v78
    %vm81 = vcmask 1039360
    %v82 = vsel %vm81, %v74, %v80
    %85 = vst [vmem:[#allocation2] sm:$0xcc] %v82
    %vm86 = vcmask 257026
    %87 = vst.msk [vmem:[#allocation2 + $0x8] sm:$0xc] %vm86, %v76
    %v88 = vld [vmem:[%s0] sm:$0x3f]
    %v90 = vcombine.high %v88, %v88
    %v92 = vunpack.c.l.s4 1983009808
    %v93 = vunpack.c.0.s8 %v92
    %v94 = vlaneseq
    %v95 = vshrl.u32 %v94, 7
    %v96 = vsub.s32 %v93, %v95
    %v97 = vrot.slane %v88, %v96
    %v99 = vunpack.c.l.s4 1983009808
    %v100 = vunpack.c.0.s8 %v99
    %v101 = vlaneseq
    %v102 = vshrl.u32 %v101, 7
    %v103 = vsub.s32 %v100, %v102
    %v104 = vrot.slane %v90, %v103
    %105 = vrot.lane.b32.xlu0 %v97, 126
    %v106 = vpop.permute.xlu0 %105
    %107 = vrot.lane.b32.xlu0 %v104, 126
    %v108 = vpop.permute.xlu0 %107
    %v109 = vrot.slane %v106, 4
    %v110 = vrot.slane %v108, 4
    %v111 = vsel %vm79, %v109, %v110
    %vm112 = vcmask 1031168
    %v113 = vsel %vm112, %v106, %v111
    %116 = vst [vmem:[#allocation2 + $0x14] sm:$0x33] %v113
    %117 = vst.msk [vmem:[#allocation2 + $0x1c] sm:$0x3] %vm54, %v108
    %v118 = vld [vmem:[%s0] sm:$0x3f]
    %v120 = vcombine.low %v118, %v118
    %v122 = vunpack.c.l.s4 1983009808
    %v123 = vunpack.c.0.s8 %v122
    %v124 = vlaneseq
    %v125 = vshrl.u32 %v124, 7
    %v126 = vsub.s32 %v123, %v125
    %v127 = vrot.slane %v120, %v126
    %v129 = vunpack.c.l.s4 1983009808
    %v130 = vunpack.c.0.s8 %v129
    %v131 = vlaneseq
    %v132 = vshrl.u32 %v131, 7
    %v133 = vsub.s32 %v130, %v132
    %v134 = vrot.slane %v118, %v133
    %135 = vrot.lane.b32.xlu0 %v127, 110
    %v136 = vpop.permute.xlu0 %135
    %137 = vrot.lane.b32.xlu0 %v134, 110
    %v138 = vpop.permute.xlu0 %137
    %v139 = vrot.slane %v136, 4
    %v140 = vrot.slane %v138, 4
    %v141 = vsel %vm79, %v139, %v140
    %vm142 = vcmask 900096
    %v143 = vsel %vm142, %v136, %v141
    %146 = vst [vmem:[#allocation2 + $0x14] sm:$0xcc] %v143
    %147 = vst.msk [vmem:[#allocation2 + $0x1c] sm:$0xc] %vm86, %v138
    %v148 = vld [vmem:[%s0] sm:$0x3f]
    %v150 = vcombine.high %v148, %v148
    %v152 = vunpack.c.l.s4 1983009808
    %v153 = vunpack.c.0.s8 %v152
    %v154 = vlaneseq
    %v155 = vshrl.u32 %v154, 7
    %v156 = vsub.s32 %v153, %v155
    %v157 = vrot.slane %v148, %v156
    %v159 = vunpack.c.l.s4 1983009808
    %v160 = vunpack.c.0.s8 %v159
    %v161 = vlaneseq
    %v162 = vshrl.u32 %v161, 7
    %v163 = vsub.s32 %v160, %v162
    %v164 = vrot.slane %v150, %v163
    %165 = vrot.lane.b32.xlu0 %v157, 109
    %v166 = vpop.permute.xlu0 %165
    %167 = vrot.lane.b32.xlu0 %v164, 109
    %v168 = vpop.permute.xlu0 %167
    %v169 = vrot.slane %v166, 4
    %v170 = vrot.slane %v168, 4
    %v171 = vsel %vm79, %v169, %v170
    %vm172 = vcmask 891904
    %v173 = vsel %vm172, %v166, %v171
    %176 = vst [vmem:[#allocation2 + $0x28] sm:$0x33] %v173
    %177 = vst.msk [vmem:[#allocation2 + $0x30] sm:$0x3] %vm54, %v168
    %v178 = vld [vmem:[%s0] sm:$0x3f]
    %v180 = vcombine.low %v178, %v178
    %v182 = vunpack.c.l.s4 1983009808
    %v183 = vunpack.c.0.s8 %v182
    %v184 = vlaneseq
    %v185 = vshrl.u32 %v184, 7
    %v186 = vsub.s32 %v183, %v185
    %v187 = vrot.slane %v180, %v186
    %v189 = vunpack.c.l.s4 1983009808
    %v190 = vunpack.c.0.s8 %v189
    %v191 = vlaneseq
    %v192 = vshrl.u32 %v191, 7
    %v193 = vsub.s32 %v190, %v192
    %v194 = vrot.slane %v178, %v193
    %195 = vrot.lane.b32.xlu0 %v187, 108
    %v196 = vpop.permute.xlu0 %195
    %197 = vrot.lane.b32.xlu0 %v194, 108
    %v198 = vpop.permute.xlu0 %197
    %v199 = vrot.slane %v196, 4
    %v200 = vrot.slane %v198, 4
    %v201 = vsel %vm79, %v199, %v200
    %vm202 = vcmask 883712
    %v203 = vsel %vm202, %v196, %v201
    %206 = vst [vmem:[#allocation2 + $0x28] sm:$0xcc] %v203
    %207 = vst.msk [vmem:[#allocation2 + $0x30] sm:$0xc] %vm86, %v198
    %v208 = vld [vmem:[%s0] sm:$0x3f]
    %v210 = vcombine.high %v208, %v208
    %v212 = vunpack.c.l.s4 1983009808
    %v213 = vunpack.c.0.s8 %v212
    %v214 = vlaneseq
    %v215 = vshrl.u32 %v214, 7
    %v216 = vsub.s32 %v213, %v215
    %v217 = vrot.slane %v208, %v216
    %v219 = vunpack.c.l.s4 1983009808
    %v220 = vunpack.c.0.s8 %v219
    %v221 = vlaneseq
    %v222 = vshrl.u32 %v221, 7
    %v223 = vsub.s32 %v220, %v222
    %v224 = vrot.slane %v210, %v223
    %225 = vrot.lane.b32.xlu0 %v217, 92
    %v226 = vpop.permute.xlu0 %225
    %227 = vrot.lane.b32.xlu0 %v224, 92
    %v228 = vpop.permute.xlu0 %227
    %v229 = vrot.slane %v226, 4
    %v230 = vrot.slane %v228, 4
    %v231 = vsel %vm79, %v229, %v230
    %vm232 = vcmask 752640
    %v233 = vsel %vm232, %v226, %v231
    %236 = vst [vmem:[#allocation2 + $0x3c] sm:$0x33] %v233
    %237 = vst.msk [vmem:[#allocation2 + $0x44] sm:$0x3] %vm54, %v228
    %v238 = vld [vmem:[%s0] sm:$0x3f]
    %v240 = vcombine.low %v238, %v238
    %v242 = vunpack.c.l.s4 1983009808
    %v243 = vunpack.c.0.s8 %v242
    %v244 = vlaneseq
    %v245 = vshrl.u32 %v244, 7
    %v246 = vsub.s32 %v243, %v245
    %v247 = vrot.slane %v240, %v246
    %v249 = vunpack.c.l.s4 1983009808
    %v250 = vunpack.c.0.s8 %v249
    %v251 = vlaneseq
    %v252 = vshrl.u32 %v251, 7
    %v253 = vsub.s32 %v250, %v252
    %v254 = vrot.slane %v238, %v253
    %255 = vrot.lane.b32.xlu0 %v247, 91
    %v256 = vpop.permute.xlu0 %255
    %257 = vrot.lane.b32.xlu0 %v254, 91
    %v258 = vpop.permute.xlu0 %257
    %v259 = vrot.slane %v256, 4
    %v260 = vrot.slane %v258, 4
    %v261 = vsel %vm79, %v259, %v260
    %vm262 = vcmask 744448
    %v263 = vsel %vm262, %v256, %v261
    %266 = vst [vmem:[#allocation2 + $0x3c] sm:$0xcc] %v263
    %267 = vst.msk [vmem:[#allocation2 + $0x44] sm:$0xc] %vm86, %v258
    %v268 = vld [vmem:[%s0] sm:$0x3f]
    %v270 = vcombine.high %v268, %v268
    %v272 = vunpack.c.l.s4 1983009808
    %v273 = vunpack.c.0.s8 %v272
    %v274 = vlaneseq
    %v275 = vshrl.u32 %v274, 7
    %v276 = vsub.s32 %v273, %v275
    %v277 = vrot.slane %v268, %v276
    %v279 = vunpack.c.l.s4 1983009808
    %v280 = vunpack.c.0.s8 %v279
    %v281 = vlaneseq
    %v282 = vshrl.u32 %v281, 7
    %v283 = vsub.s32 %v280, %v282
    %v284 = vrot.slane %v270, %v283
    %285 = vrot.lane.b32.xlu0 %v277, 90
    %v286 = vpop.permute.xlu0 %285
    %287 = vrot.lane.b32.xlu0 %v284, 90
    %v288 = vpop.permute.xlu0 %287
    %v289 = vrot.slane %v286, 4
    %v290 = vrot.slane %v288, 4
    %v291 = vsel %vm79, %v289, %v290
    %vm292 = vcmask 736256
    %v293 = vsel %vm292, %v286, %v291
    %296 = vst [vmem:[#allocation2 + $0x50] sm:$0x33] %v293
    %297 = vst.msk [vmem:[#allocation2 + $0x58] sm:$0x3] %vm54, %v288
    %s298 = scalar_lea.vmem %s0, 6
    %v299 = vld [vmem:[%s298] sm:$0x3f]
    %v301 = vcombine.high %v299, %v299
    %v303 = vunpack.c.l.s4 1983009808
    %v304 = vunpack.c.0.s8 %v303
    %v305 = vlaneseq
    %v306 = vshrl.u32 %v305, 7
    %v307 = vsub.s32 %v304, %v306
    %v308 = vrot.slane %v299, %v307
    %v310 = vunpack.c.l.s4 1983009808
    %v311 = vunpack.c.0.s8 %v310
    %v312 = vlaneseq
    %v313 = vshrl.u32 %v312, 7
    %v314 = vsub.s32 %v311, %v313
    %v315 = vrot.slane %v301, %v314
    %316 = vrot.lane.b32.xlu0 %v308, 32
    %v317 = vpop.permute.xlu0 %316
    %318 = vrot.lane.b32.xlu0 %v315, 32
    %v319 = vpop.permute.xlu0 %318
    %v320 = vrot.slane %v317, 4
    %vm321 = vcmask 261120
    %v322 = vsel %vm321, %v320, %v317
    %v323 = vsel %vm321, %v320, %v319
    %vm326 = vcmask 1041664
    %vm327 = vcmask 1045508
    %vm328 = vmor %vm327, %vm326
    %329 = vst.msk [vmem:[#allocation2 + $0x8] sm:$0x33] %vm328, %v322
    %vm330 = vcmask 517120
    %331 = vst.msk [vmem:[#allocation2 + $0x10] sm:$0x3] %vm330, %v323
    %v332 = vld [vmem:[%s298] sm:$0x3f]
    %v334 = vcombine.low %v332, %v332
    %v336 = vunpack.c.l.s4 1983009808
    %v337 = vunpack.c.0.s8 %v336
    %v338 = vlaneseq
    %v339 = vshrl.u32 %v338, 7
    %v340 = vsub.s32 %v337, %v339
    %v341 = vrot.slane %v334, %v340
    %v343 = vunpack.c.l.s4 1983009808
    %v344 = vunpack.c.0.s8 %v343
    %v345 = vlaneseq
    %v346 = vshrl.u32 %v345, 7
    %v347 = vsub.s32 %v344, %v346
    %v348 = vrot.slane %v332, %v347
    %349 = vrot.lane.b32.xlu0 %v341, 31
    %v350 = vpop.permute.xlu0 %349
    %351 = vrot.lane.b32.xlu0 %v348, 31
    %v352 = vpop.permute.xlu0 %351
    %v353 = vrot.slane %v350, 4
    %vm354 = vcmask 252928
    %v355 = vsel %vm354, %v353, %v350
    %v356 = vsel %vm354, %v353, %v352
    %vm359 = vcmask 1043714
    %vm360 = vcmask 1047558
    %vm361 = vmor %vm360, %vm359
    %362 = vst.msk [vmem:[#allocation2 + $0x8] sm:$0xcc] %vm361, %v355
    %vm363 = vcmask 519170
    %364 = vst.msk [vmem:[#allocation2 + $0x10] sm:$0xc] %vm363, %v356
    %v365 = vld [vmem:[%s298] sm:$0x3f]
    %v367 = vcombine.high %v365, %v365
    %v369 = vunpack.c.l.s4 1983009808
    %v370 = vunpack.c.0.s8 %v369
    %v371 = vlaneseq
    %v372 = vshrl.u32 %v371, 7
    %v373 = vsub.s32 %v370, %v372
    %v374 = vrot.slane %v365, %v373
    %v376 = vunpack.c.l.s4 1983009808
    %v377 = vunpack.c.0.s8 %v376
    %v378 = vlaneseq
    %v379 = vshrl.u32 %v378, 7
    %v380 = vsub.s32 %v377, %v379
    %v381 = vrot.slane %v367, %v380
    %382 = vrot.lane.b32.xlu0 %v374, 30
    %v383 = vpop.permute.xlu0 %382
    %384 = vrot.lane.b32.xlu0 %v381, 30
    %v385 = vpop.permute.xlu0 %384
    %v386 = vrot.slane %v383, 4
    %vm387 = vcmask 244736
    %v388 = vsel %vm387, %v386, %v383
    %v389 = vsel %vm387, %v386, %v385
    %392 = vst.msk [vmem:[#allocation2 + $0x1c] sm:$0x33] %vm328, %v388
    %393 = vst.msk [vmem:[#allocation2 + $0x24] sm:$0x3] %vm330, %v389
    %v394 = vld [vmem:[%s298] sm:$0x3f]
    %v396 = vcombine.low %v394, %v394
    %v398 = vunpack.c.l.s4 1983009808
    %v399 = vunpack.c.0.s8 %v398
    %v400 = vlaneseq
    %v401 = vshrl.u32 %v400, 7
    %v402 = vsub.s32 %v399, %v401
    %v403 = vrot.slane %v396, %v402
    %v405 = vunpack.c.l.s4 1983009808
    %v406 = vunpack.c.0.s8 %v405
    %v407 = vlaneseq
    %v408 = vshrl.u32 %v407, 7
    %v409 = vsub.s32 %v406, %v408
    %v410 = vrot.slane %v394, %v409
    %411 = vrot.lane.b32.xlu0 %v403, 14
    %v412 = vpop.permute.xlu0 %411
    %413 = vrot.lane.b32.xlu0 %v410, 14
    %v414 = vpop.permute.xlu0 %413
    %v415 = vrot.slane %v412, 4
    %vm416 = vcmask 113664
    %v417 = vsel %vm416, %v415, %v412
    %v418 = vsel %vm416, %v415, %v414
    %421 = vst.msk [vmem:[#allocation2 + $0x1c] sm:$0xcc] %vm361, %v417
    %422 = vst.msk [vmem:[#allocation2 + $0x24] sm:$0xc] %vm363, %v418
    %v423 = vld [vmem:[%s298] sm:$0x3f]
    %v425 = vcombine.high %v423, %v423
    %v427 = vunpack.c.l.s4 1983009808
    %v428 = vunpack.c.0.s8 %v427
    %v429 = vlaneseq
    %v430 = vshrl.u32 %v429, 7
    %v431 = vsub.s32 %v428, %v430
    %v432 = vrot.slane %v423, %v431
    %v434 = vunpack.c.l.s4 1983009808
    %v435 = vunpack.c.0.s8 %v434
    %v436 = vlaneseq
    %v437 = vshrl.u32 %v436, 7
    %v438 = vsub.s32 %v435, %v437
    %v439 = vrot.slane %v425, %v438
    %440 = vrot.lane.b32.xlu0 %v432, 13
    %v441 = vpop.permute.xlu0 %440
    %442 = vrot.lane.b32.xlu0 %v439, 13
    %v443 = vpop.permute.xlu0 %442
    %v444 = vrot.slane %v441, 4
    %vm445 = vcmask 105472
    %v446 = vsel %vm445, %v444, %v441
    %v447 = vsel %vm445, %v444, %v443
    %450 = vst.msk [vmem:[#allocation2 + $0x30] sm:$0x33] %vm328, %v446
    %451 = vst.msk [vmem:[#allocation2 + $0x38] sm:$0x3] %vm330, %v447
    %v452 = vld [vmem:[%s298] sm:$0x3f]
    %v454 = vcombine.low %v452, %v452
    %v456 = vunpack.c.l.s4 1983009808
    %v457 = vunpack.c.0.s8 %v456
    %v458 = vlaneseq
    %v459 = vshrl.u32 %v458, 7
    %v460 = vsub.s32 %v457, %v459
    %v461 = vrot.slane %v454, %v460
    %v463 = vunpack.c.l.s4 1983009808
    %v464 = vunpack.c.0.s8 %v463
    %v465 = vlaneseq
    %v466 = vshrl.u32 %v465, 7
    %v467 = vsub.s32 %v464, %v466
    %v468 = vrot.slane %v452, %v467
    %469 = vrot.lane.b32.xlu0 %v461, 12
    %v470 = vpop.permute.xlu0 %469
    %471 = vrot.lane.b32.xlu0 %v468, 12
    %v472 = vpop.permute.xlu0 %471
    %v473 = vrot.slane %v470, 4
    %vm474 = vcmask 97280
    %v475 = vsel %vm474, %v473, %v470
    %v476 = vsel %vm474, %v473, %v472
    %479 = vst.msk [vmem:[#allocation2 + $0x30] sm:$0xcc] %vm361, %v475
    %480 = vst.msk [vmem:[#allocation2 + $0x38] sm:$0xc] %vm363, %v476
    %v481 = vld [vmem:[%s298] sm:$0x3f]
    %v483 = vcombine.high %v481, %v481
    %v485 = vunpack.c.l.s4 1983009808
    %v486 = vunpack.c.0.s8 %v485
    %v487 = vlaneseq
    %v488 = vshrl.u32 %v487, 7
    %v489 = vsub.s32 %v486, %v488
    %v490 = vrot.slane %v481, %v489
    %v492 = vunpack.c.l.s4 1983009808
    %v493 = vunpack.c.0.s8 %v492
    %v494 = vlaneseq
    %v495 = vshrl.u32 %v494, 7
    %v496 = vsub.s32 %v493, %v495
    %v497 = vrot.slane %v483, %v496
    %498 = vrot.lane.b32.xlu0 %v490, 124
    %v499 = vpop.permute.xlu0 %498
    %500 = vrot.lane.b32.xlu0 %v497, 124
    %v501 = vpop.permute.xlu0 %500
    %v502 = vrot.slane %v499, 4
    %v503 = vrot.slane %v501, 4
    %v504 = vsel %vm79, %v502, %v503
    %vm505 = vcmask 1014784
    %v506 = vsel %vm505, %v499, %v504
    %509 = vst.msk [vmem:[#allocation2 + $0x44] sm:$0x33] %vm328, %v506
    %510 = vst.msk [vmem:[#allocation2 + $0x4c] sm:$0x3] %vm330, %v501
    %v511 = vld [vmem:[%s298] sm:$0x3f]
    %v513 = vcombine.low %v511, %v511
    %v515 = vunpack.c.l.s4 1983009808
    %v516 = vunpack.c.0.s8 %v515
    %v517 = vlaneseq
    %v518 = vshrl.u32 %v517, 7
    %v519 = vsub.s32 %v516, %v518
    %v520 = vrot.slane %v513, %v519
    %v522 = vunpack.c.l.s4 1983009808
    %v523 = vunpack.c.0.s8 %v522
    %v524 = vlaneseq
    %v525 = vshrl.u32 %v524, 7
    %v526 = vsub.s32 %v523, %v525
    %v527 = vrot.slane %v511, %v526
    %528 = vrot.lane.b32.xlu0 %v520, 123
    %v529 = vpop.permute.xlu0 %528
    %530 = vrot.lane.b32.xlu0 %v527, 123
    %v531 = vpop.permute.xlu0 %530
    %v532 = vrot.slane %v529, 4
    %v533 = vrot.slane %v531, 4
    %v534 = vsel %vm79, %v532, %v533
    %vm535 = vcmask 1006592
    %v536 = vsel %vm535, %v529, %v534
    %539 = vst.msk [vmem:[#allocation2 + $0x44] sm:$0xcc] %vm361, %v536
    %540 = vst.msk [vmem:[#allocation2 + $0x4c] sm:$0xc] %vm363, %v531
    %v541 = vld [vmem:[%s298] sm:$0x3f]
    %v543 = vcombine.high %v541, %v541
    %v545 = vunpack.c.l.s4 1983009808
    %v546 = vunpack.c.0.s8 %v545
    %v547 = vlaneseq
    %v548 = vshrl.u32 %v547, 7
    %v549 = vsub.s32 %v546, %v548
    %v550 = vrot.slane %v541, %v549
    %v552 = vunpack.c.l.s4 1983009808
    %v553 = vunpack.c.0.s8 %v552
    %v554 = vlaneseq
    %v555 = vshrl.u32 %v554, 7
    %v556 = vsub.s32 %v553, %v555
    %v557 = vrot.slane %v543, %v556
    %558 = vrot.lane.b32.xlu0 %v550, 122
    %v559 = vpop.permute.xlu0 %558
    %560 = vrot.lane.b32.xlu0 %v557, 122
    %v561 = vpop.permute.xlu0 %560
    %v562 = vrot.slane %v559, 4
    %v563 = vrot.slane %v561, 4
    %v564 = vsel %vm79, %v562, %v563
    %vm565 = vcmask 998400
    %v566 = vsel %vm565, %v559, %v564
    %569 = vst.msk [vmem:[#allocation2 + $0x58] sm:$0x33] %vm328, %v566
    %570 = vst.msk [vmem:[#allocation2 + $0x60] sm:$0x3] %vm330, %v561
    %v571 = vld [vmem:[#allocation4] sm:$0xf]
    %v572 = vld [vmem:[#allocation2] sm:$0xff]
    %v573 = vld [vmem:[#allocation2 + $0x8] sm:$0xff]
    %v574 = vld [vmem:[#allocation2 + $0x10] sm:$0xf]
    %v575 = vld [vmem:[#allocation2 + $0x14] sm:$0xff]
    %v576 = vld [vmem:[#allocation2 + $0x1c] sm:$0xff]
    %v577 = vld [vmem:[#allocation2 + $0x24] sm:$0xf]
    %v578 = vld [vmem:[#allocation2 + $0x28] sm:$0xff]
    %v579 = vld [vmem:[#allocation2 + $0x30] sm:$0xff]
    %v580 = vld [vmem:[#allocation2 + $0x38] sm:$0xf]
    %v581 = vld [vmem:[#allocation2 + $0x3c] sm:$0xff]
    %v582 = vld [vmem:[#allocation2 + $0x44] sm:$0xff]
    %v583 = vld [vmem:[#allocation2 + $0x4c] sm:$0xf]
    %v584 = vld [vmem:[#allocation2 + $0x50] sm:$0x33]
    %v585 = vld [vmem:[#allocation2 + $0x58] sm:$0x33]
    %v586 = vld [vmem:[#allocation2 + $0x60] sm:$0x3]
    %v602 = vunpack.c.l.b16 %v572
    %v603 = vunpack.c.h.b16 %v572
    %v604 = vunpack.c.l.b16 %v573
    %v605 = vunpack.c.h.b16 %v573
    %v606 = vunpack.c.l.b16 %v574
    %v607 = vunpack.c.l.b16 %v575
    %v608 = vunpack.c.h.b16 %v575
    %v609 = vunpack.c.l.b16 %v576
    %v610 = vunpack.c.h.b16 %v576
    %v611 = vunpack.c.l.b16 %v577
    %v612 = vunpack.c.l.b16 %v578
    %v613 = vunpack.c.h.b16 %v578
    %v614 = vunpack.c.l.b16 %v579
    %v615 = vunpack.c.h.b16 %v579
    %v616 = vunpack.c.l.b16 %v580
    %v617 = vunpack.c.l.b16 %v581
    %v618 = vunpack.c.h.b16 %v581
    %v619 = vunpack.c.l.b16 %v582
    %v620 = vunpack.c.h.b16 %v582
    %v621 = vunpack.c.l.b16 %v583
    %v622 = vunpack.c.l.b16 %v584
    %v623 = vunpack.c.h.b16 %v584
    %v624 = vunpack.c.l.b16 %v585
    %v625 = vunpack.c.h.b16 %v585
    %v626 = vunpack.c.l.b16 %v586
    %v627 = vpack.c.b16 %v607, %v602
    %v628 = vpack.c.b16 %v608, %v603
    %v629 = vpack.c.b16 %v609, %v604
    %v630 = vpack.c.b16 %v610, %v605
    %v631 = vpack.c.b16 %v611, %v606
    %v632 = vpack.c.b16 %v617, %v612
    %v633 = vpack.c.b16 %v618, %v613
    %v634 = vpack.c.b16 %v619, %v614
    %v635 = vpack.c.b16 %v620, %v615
    %v636 = vpack.c.b16 %v621, %v616
    %v637 = vpack.c.b16 %v622, %v622
    %v638 = vpack.c.b16 %v623, %v623
    %v639 = vpack.c.b16 %v624, %v624
    %v640 = vpack.c.b16 %v625, %v625
    %v641 = vpack.c.b16 %v626, %v626
    %vm652 = vcmask 293888
    %v654 = vsel %vm652, %v571, 0
    %vm656 = vcmask 1041408
    %v658 = vsel %vm656, %v637, 0
    %v661 = vsel %vm656, %v638, 0
    %v664 = vsel %vm656, %v639, 0
    %v667 = vsel %vm656, %v640, 0
    %v670 = vsel %vm656, %v641, 0
    %672 = vmatprep.subr.bf16.mxu0 0
    %673 = vmatpush1.bf16.msra.mxu0 0
    %674 = vmatprep.subr.bf16.mxu0 0
    %675 = vmatpush1.bf16.msra.mxu0 0
    %676 = vmatprep.subr.bf16.mxu0 0
    %677 = vmatpush1.bf16.msra.mxu0 0
    %678 = vmatprep.subr.bf16.mxu0 0
    %679 = vmatpush1.bf16.msra.mxu0 0
    %680 = vmatprep.subr.bf16.mxu0 0
    %681 = vmatpush1.bf16.msra.mxu0 0
    %682 = vmatprep.subr.bf16.mxu0 %v661
    %683 = vmatpush1.bf16.msra.mxu0 %v658
    %684 = vmatprep.subr.bf16.mxu0 %v633
    %685 = vmatpush1.bf16.msra.mxu0 %v632
    %686 = vmatprep.subr.bf16.mxu0 %v628
    %687 = vmatpush1.bf16.msra.mxu0 %v627
    %688 = vmatprep.subr.bf16.mxu0 0
    %689 = vmatpush2.bf16.msra.mxu0 0
    %690 = vmatprep.subr.bf16.mxu0 0
    %691 = vmatpush2.bf16.msra.mxu0 0
    %692 = vmatprep.subr.bf16.mxu0 0
    %693 = vmatpush2.bf16.msra.mxu0 0
    %694 = vmatprep.subr.bf16.mxu0 0
    %695 = vmatpush2.bf16.msra.mxu0 0
    %696 = vmatprep.subr.bf16.mxu0 0
    %697 = vmatpush2.bf16.msra.mxu0 0
    %698 = vmatprep.subr.bf16.mxu0 0
    %699 = vmatpush2.bf16.msra.mxu0 0
    %700 = vmatprep.subr.bf16.mxu0 0
    %701 = vmatpush2.bf16.msra.mxu0 0
    %702 = vmatprep.subr.bf16.mxu0 0
    %703 = vmatpush2.bf16.msra.mxu0 0
    %704 = vmatprep.mubr.bf16.mxu0 0
    %705 = vmatmul.mubr.bf16.gmra.mxu0 %v654
    %v706 = vpop.f32.mrf.mxu0
    %v707 = vadd.f32 0.0, %v706
    %v708 = vpop.f32.mrf.mxu0
    %v709 = vadd.f32 0.0, %v708
    %v710 = vpop.f32.mrf.mxu0
    %v711 = vpop.f32.mrf.mxu0
    %712 = vdwg.mxu0
    %713 = vmatprep.subr.bf16.mxu0 0
    %714 = vmatpush1.bf16.msra.mxu0 0
    %715 = vmatprep.subr.bf16.mxu0 0
    %716 = vmatpush1.bf16.msra.mxu0 0
    %717 = vmatprep.subr.bf16.mxu0 0
    %718 = vmatpush1.bf16.msra.mxu0 0
    %719 = vmatprep.subr.bf16.mxu0 0
    %720 = vmatpush1.bf16.msra.mxu0 0
    %721 = vmatprep.subr.bf16.mxu0 0
    %722 = vmatpush1.bf16.msra.mxu0 0
    %723 = vmatprep.subr.bf16.mxu0 %v667
    %724 = vmatpush1.bf16.msra.mxu0 %v664
    %725 = vmatprep.subr.bf16.mxu0 %v635
    %726 = vmatpush1.bf16.msra.mxu0 %v634
    %727 = vmatprep.subr.bf16.mxu0 %v630
    %728 = vmatpush1.bf16.msra.mxu0 %v629
    %729 = vmatprep.subr.bf16.mxu0 0
    %730 = vmatpush2.bf16.msra.mxu0 0
    %731 = vmatprep.subr.bf16.mxu0 0
    %732 = vmatpush2.bf16.msra.mxu0 0
    %733 = vmatprep.subr.bf16.mxu0 0
    %734 = vmatpush2.bf16.msra.mxu0 0
    %735 = vmatprep.subr.bf16.mxu0 0
    %736 = vmatpush2.bf16.msra.mxu0 0
    %737 = vmatprep.subr.bf16.mxu0 0
    %738 = vmatpush2.bf16.msra.mxu0 0
    %739 = vmatprep.subr.bf16.mxu0 0
    %740 = vmatpush2.bf16.msra.mxu0 0
    %741 = vmatprep.subr.bf16.mxu0 0
    %742 = vmatpush2.bf16.msra.mxu0 0
    %743 = vmatprep.subr.bf16.mxu0 0
    %744 = vmatpush2.bf16.msra.mxu0 0
    %745 = vmatprep.mubr.bf16.mxu0 0
    %746 = vmatmul.mubr.bf16.gmra.mxu0 %v654
    %v747 = vpop.f32.mrf.mxu0
    %v748 = vadd.f32 0.0, %v747
    %v749 = vpop.f32.mrf.mxu0
    %v750 = vadd.f32 0.0, %v749
    %v751 = vpop.f32.mrf.mxu0
    %v752 = vpop.f32.mrf.mxu0
    %753 = vdwg.mxu0
    %754 = vmatprep.subr.bf16.mxu0 0
    %755 = vmatpush1.bf16.msra.mxu0 0
    %756 = vmatprep.subr.bf16.mxu0 0
    %757 = vmatpush1.bf16.msra.mxu0 0
    %758 = vmatprep.subr.bf16.mxu0 0
    %759 = vmatpush1.bf16.msra.mxu0 0
    %760 = vmatprep.subr.bf16.mxu0 0
    %761 = vmatpush1.bf16.msra.mxu0 0
    %762 = vmatprep.subr.bf16.mxu0 0
    %763 = vmatpush1.bf16.msra.mxu0 0
    %764 = vmatprep.subr.bf16.mxu0 0
    %765 = vmatpush1.bf16.msra.mxu0 %v670
    %766 = vmatprep.subr.bf16.mxu0 0
    %767 = vmatpush1.bf16.msra.mxu0 %v636
    %768 = vmatprep.subr.bf16.mxu0 0
    %769 = vmatpush1.bf16.msra.mxu0 %v631
    %770 = vmatprep.subr.bf16.mxu0 0
    %771 = vmatpush2.bf16.msra.mxu0 0
    %772 = vmatprep.subr.bf16.mxu0 0
    %773 = vmatpush2.bf16.msra.mxu0 0
    %774 = vmatprep.subr.bf16.mxu0 0
    %775 = vmatpush2.bf16.msra.mxu0 0
    %776 = vmatprep.subr.bf16.mxu0 0
    %777 = vmatpush2.bf16.msra.mxu0 0
    %778 = vmatprep.subr.bf16.mxu0 0
    %779 = vmatpush2.bf16.msra.mxu0 0
    %780 = vmatprep.subr.bf16.mxu0 0
    %781 = vmatpush2.bf16.msra.mxu0 0
    %782 = vmatprep.subr.bf16.mxu0 0
    %783 = vmatpush2.bf16.msra.mxu0 0
    %784 = vmatprep.subr.bf16.mxu0 0
    %785 = vmatpush2.bf16.msra.mxu0 0
    %786 = vmatprep.mubr.bf16.mxu0 0
    %787 = vmatmul.mubr.bf16.gmra.mxu0 %v654
    %v788 = vpop.f32.mrf.mxu0
    %v789 = vadd.f32 0.0, %v788
    %v790 = vpop.f32.mrf.mxu0
    %v791 = vpop.f32.mrf.mxu0
    %v792 = vpop.f32.mrf.mxu0
    %793 = vdwg.mxu0
    %794 = vst [vmem:[#allocation3] sm:$0xff] %v707
    %795 = vst [vmem:[#allocation3 + $0x8] sm:$0xff] %v709
    %796 = vst [vmem:[#allocation3 + $0x10] sm:$0xff] %v748
    %797 = vst [vmem:[#allocation3 + $0x18] sm:$0xff] %v750
    %vm798 = vcmask 523264
    %799 = vst.msk [vmem:[#allocation3 + $0x20] sm:$0xff] %vm798, %v789
    %v800 = vld [vmem:[%s4] sm:$0x1f]
    %v802 = vlaneseq
    %v803 = vshrl.u32 %v802, 7
    %v804 = vsub.s32 0, %v803
    %v805 = vrot.slane %v800, %v804
    %v806 = vlaneseq
    %v807 = vshrl.u32 %v806, 7
    %v808 = vsub.s32 1, %v807
    %v809 = vrot.slane %v800, %v808
    %v810 = vlaneseq
    %v811 = vshrl.u32 %v810, 7
    %v812 = vsub.s32 2, %v811
    %v813 = vrot.slane %v800, %v812
    %v814 = vlaneseq
    %v815 = vshrl.u32 %v814, 7
    %v816 = vsub.s32 3, %v815
    %v817 = vrot.slane %v800, %v816
    %v818 = vlaneseq
    %v819 = vshrl.u32 %v818, 7
    %v820 = vsub.s32 4, %v819
    %v821 = vrot.slane %v800, %v820
    %v827 = vmul.f32 %v707, %v805
    %v828 = vmul.f32 %v709, %v809
    %v829 = vmul.f32 %v748, %v813
    %v830 = vmul.f32 %v750, %v817
    %v831 = vmul.f32 %v789, %v821
    %v832 = vadd.f32 %v827, %v828
    %v833 = vadd.f32 %v832, %v829
    %v834 = vadd.f32 %v833, %v830
    %v835 = vsel %vm798, %v831, 0.0
    %v836 = vadd.f32 %v834, %v835
    %837 = vadd.xlane.f32.xlu0 %v836
    %v838 = vpop.xlane.xlu0 %837
    %v839 = vmul.f32 %v838, 0.001953125
    %v840 = vmul.f32 %v827, %v827
    %v841 = vmul.f32 %v828, %v828
    %v842 = vmul.f32 %v829, %v829
    %v843 = vmul.f32 %v830, %v830
    %v844 = vmul.f32 %v831, %v831
    %v845 = vadd.f32 %v840, %v841
    %v846 = vadd.f32 %v845, %v842
    %v847 = vadd.f32 %v846, %v843
    %v848 = vsel %vm798, %v844, 0.0
    %v849 = vadd.f32 %v847, %v848
    %850 = vadd.xlane.f32.xlu0 %v849
    %v851 = vpop.xlane.xlu0 %850
    %v852 = vmul.f32 %v851, 0.001953125
    %v853 = vmul.f32 %v839, %v839
    %v854 = vsub.f32 %v852, %v853
    %v855 = vld [vmem:[%s2] sm:$0xff]
    %v856 = vadd.f32 %v854, 1e-05
    %v857 = vrsqrt.pop %v856
    %v858 = vmul.f32 %v855, %v857
    %v859 = vld [vmem:[%s3] sm:$0xff]
    %v860 = vmul.f32 %v839, %v858
    %v861 = vsub.f32 %v859, %v860
    %v862 = vld [vmem:[#allocation3] sm:$0xff]
    %v863 = vld [vmem:[#allocation3 + $0x8] sm:$0xff]
    %v864 = vld [vmem:[#allocation3 + $0x10] sm:$0xff]
    %866 = vset.pattern.permute.xlu0 0
    %867 = vperm.xlu0 %866, %v858
    %v868 = vpop.permute.xlu0 %867
    %v870 = vmul.f32 %v862, %v868
    %v871 = vmul.f32 %v863, %v868
    %v872 = vmul.f32 %v864, %v868
    %874 = vset.pattern.permute.xlu0 0
    %875 = vperm.xlu0 %874, %v861
    %v876 = vpop.permute.xlu0 %875
    %v878 = vadd.f32 %v870, %v876
    %v879 = vadd.f32 %v871, %v876
    %v880 = vadd.f32 %v872, %v876
    %v881 = vmax.f32 %v878, 0.0
    %v882 = vmax.f32 %v879, 0.0
    %v883 = vmax.f32 %v880, 0.0
    %884 = vst [vmem:[#allocation7] sm:$0xff] %v881
    %885 = vst [vmem:[#allocation7 + $0x8] sm:$0xff] %v882
    %vm886 = vcmask 261120
    %887 = vst.msk [vmem:[#allocation7 + $0x10] sm:$0xff] %vm886, %v883
    %v888 = vld [vmem:[#allocation3 + $0x10] sm:$0xff]
    %v889 = vld [vmem:[#allocation3 + $0x18] sm:$0xff]
    %v890 = vld [vmem:[#allocation3 + $0x20] sm:$0xff]
    %v891 = vmul.f32 %v888, %v868
    %v892 = vmul.f32 %v889, %v868
    %v893 = vmul.f32 %v890, %v868
    %v894 = vadd.f32 %v891, %v876
    %v895 = vadd.f32 %v892, %v876
    %v896 = vadd.f32 %v893, %v876
    %v897 = vmax.f32 %v894, 0.0
    %v898 = vmax.f32 %v895, 0.0
    %v899 = vmax.f32 %v896, 0.0
    %903 = vrot.lane.b32.xlu0 %v897, 96
    %v904 = vpop.permute.xlu0 %903
    %905 = vrot.lane.b32.xlu0 %v898, 96
    %v906 = vpop.permute.xlu0 %905
    %907 = vrot.lane.b32.xlu0 %v899, 96
    %v908 = vpop.permute.xlu0 %907
    %vm909 = vcmask 785408
    %v910 = vsel %vm909, %v904, %v906
    %v911 = vsel %vm909, %v906, %v908
    %s915 = scalar_lea.vmem [#allocation7], 24
    %916 = vst [vmem:[%s915] sm:$0xff] %v910
    %917 = vst [vmem:[%s915 + $0x8] sm:$0xff] %v911
    %918 = vst.msk [vmem:[%s915 + $0x10] sm:$0xff] %vm886, %v908
    // Predicated region
    $region26: #{tpu_custom_call.1} parent=1 // pred_check
      _
    $region27: #{tpu_custom_call.1} parent=1 // pred_check_branch
      %920 = sbr.rel (0) target = $region29
    $region28: #{tpu_custom_call.1} parent=1 // pred_region
      %s922 = ssub.s32 768, 768
      %923 = vsyncadd [#allocation6], %s922
      %s924 = sshll.u32 [#allocation7], 4
      %s925 = int_to_ptr.vmem [resolvable:$true] %s924
      %930 = dma.vmem_to_hbm [thread:$0]  %s925, 768, %s5, [#allocation6], 384, 384, 24
    $region29: #{tpu_custom_call.1} parent=1 // pred_fallthru
      _
    // Predicated region
    $region30: #{tpu_custom_call.1} parent=1 // pred_check
      _
    $region31: #{tpu_custom_call.1} parent=1 // pred_check_branch
      %932 = sbr.rel (0) target = $region33
    $region32: #{tpu_custom_call.1} parent=1 // pred_region
      %933 = dma.done [#allocation6], 768
    $region33: #{tpu_custom_call.1} parent=1 // pred_fallthru
      _
    %934 = vsyncpa [#allocation5], 1
    %935 = vsyncpa [#allocation6], 1

</llo_original>
